<compile_context>
chip_gen: v5e
topology: v5e:2x2
jax: 0.10.0
libtpu: 0.0.40
codegen_flags: <defaults>
</compile_context>

<pallas_src>
import functools

import jax
import jax.numpy as jnp
from jax.experimental import pallas as pl
from jax.experimental.pallas import tpu as pltpu


_BLOCK_B = 8  # batch rows per grid step (sublane multiple)


def _round_up(x, m):
    return (x + m - 1) // m * m


# ---------------------------------------------------------------------------
# In-kernel math helpers (VPU / EUP ops; matmuls feed the MXU in bf16 with
# f32 accumulation).
# ---------------------------------------------------------------------------
def _elu(x):
    return jnp.where(x > 0, x, jnp.exp(x) - 1.0)


def _softplus(x):
    return jnp.logaddexp(x, 0.0)


def _mm(a_f32, w_bf16):
    # bf16 MXU operands, f32 accumulation (elementwise math stays f32).
    return jnp.dot(a_f32.astype(jnp.bfloat16), w_bf16,
                   preferred_element_type=jnp.float32)


# ---------------------------------------------------------------------------
# The Pallas kernel: full RepresentationModel.forward for one batch block.
# ---------------------------------------------------------------------------
def rssm_repr_kernel(
    x_in_ref,        # [Bb, A+S]   cat([prev_action, prev_stoch])
    prev_deter_ref,  # [Bb, D]
    obs_embed_ref,   # [Bb, E]
    eps_ref,         # [Bb, 2S]    cat([eps_prior, eps_post])
    w1_ref,          # [A+S, H]    RnnInputModel
    w_ih_ref,        # [H, 3D]     GRU input weights  (gate order r|z|n)
    w_hh_ref,        # [D, 3D]     GRU hidden weights (gate order r|z|n)
    wp1_ref,         # [H, H]      prior head layer 1
    wp2_ref,         # [H, 2S]     prior head layer 2 (mean|std)
    wq1_ref,         # [D+E, H]    posterior head layer 1
    wq2_ref,         # [H, 2S]     posterior head layer 2 (mean|std)
    b_h_ref,         # [7, H]      rows: b1, b_r, b_z, b_in, b_hn, bp1, bq1
    b_2s_ref,        # [2, 2S]     rows: bp2, bq2
    out_ref,         # [Bb, OUT_PAD]  lane-dense output slab
):
    S = eps_ref.shape[-1] // 2
    D = prev_deter_ref.shape[-1]

    x_in = x_in_ref[...]
    h_prev = prev_deter_ref[...]
    obs = obs_embed_ref[...]
    eps = eps_ref[...]

    b1 = b_h_ref[0:1, :]
    b_r = b_h_ref[1:2, :]
    b_z = b_h_ref[2:3, :]
    b_in = b_h_ref[3:4, :]
    b_hn = b_h_ref[4:5, :]
    bp1 = b_h_ref[5:6, :]
    bq1 = b_h_ref[6:7, :]
    bp2 = b_2s_ref[0:1, :]
    bq2 = b_2s_ref[1:2, :]

    # ---- RnnInputModel: elu(Linear(cat([action, stoch]))) -------------------
    x_rnn = _elu(_mm(x_in, w1_ref[...]) + b1)

    # ---- GRUCell (PyTorch semantics) — two fused matmuls --------------------
    gi = _mm(x_rnn, w_ih_ref[...])    # [Bb, 3D]
    gh = _mm(h_prev, w_hh_ref[...])   # [Bb, 3D]
    r = jax.nn.sigmoid(gi[:, 0:D] + gh[:, 0:D] + b_r)
    z = jax.nn.sigmoid(gi[:, D:2 * D] + gh[:, D:2 * D] + b_z)
    n = jnp.tanh(gi[:, 2 * D:3 * D] + b_in + r * (gh[:, 2 * D:3 * D] + b_hn))
    deter = (1.0 - z) * n + z * h_prev

    # ---- Transition prior head ----------------------------------------------
    hp = _elu(_mm(deter, wp1_ref[...]) + bp1)
    pms = _mm(hp, wp2_ref[...]) + bp2                 # [Bb, 2S]
    prior_mean = pms[:, 0:S]
    prior_std = _softplus(pms[:, S:2 * S]) + 1000000.1     # softplus + 0.1 + 1e6
    # rsample of Normal(mean + 1e6, std), then + 1e6 again == mean + std*eps + 2e6
    prior_stoch = prior_mean + prior_std * eps[:, 0:S] + 2000000.0

    # ---- Posterior head: Linear(cat([deter, obs_embed])) -> ELU -> Linear ---
    hq = _elu(_mm(jnp.concatenate([deter, obs], axis=-1), wq1_ref[...]) + bq1)
    qms = _mm(hq, wq2_ref[...]) + bq2                 # [Bb, 2S]
    post_mean = qms[:, 0:S]
    post_std = _softplus(qms[:, S:2 * S]) + 0.1
    post_stoch = post_mean + post_std * eps[:, S:2 * S]

    # ---- Single lane-dense output store --------------------------------------
    pieces = [prior_mean, prior_std, prior_stoch, deter,
              post_mean, post_std, post_stoch]
    slab = jnp.concatenate(pieces, axis=-1)
    pad = out_ref.shape[-1] - slab.shape[-1]
    if pad > 0:
        slab = jnp.concatenate(
            [slab, jnp.zeros((slab.shape[0], pad), slab.dtype)], axis=-1)
    out_ref[...] = slab


# ---------------------------------------------------------------------------
# Parameter construction: PyTorch-style Linear init, stored pre-packed.
# ---------------------------------------------------------------------------
def make_params(key, obs_embed_size, action_size, stoch_size, deter_size,
                hidden_size):
    assert hidden_size == deter_size, (
        "Transition.StochasticPriorModel expects hidden_size == deterministic_size "
        "(as in the PyTorch defaults 200/200)")
    A, S, D, H, E = action_size, stoch_size, deter_size, hidden_size, obs_embed_size
    bf16, f32 = jnp.bfloat16, jnp.float32

    def lin(k, fan_in, fan_out):
        kw, kb = jax.random.split(k)
        bound = 1.0 / jnp.sqrt(fan_in)
        w = jax.random.uniform(kw, (fan_in, fan_out), f32, -bound, bound)
        b = jax.random.uniform(kb, (fan_out,), f32, -bound, bound)
        return w, b

    keys = jax.random.split(key, 7)
    w1, b1 = lin(keys[0], A + S, H)              # RnnInputModel (cat input)
    wih, bih = lin(keys[1], H, 3 * D)            # GRU weight_ih.T (r|z|n cols)
    whh, bhh = lin(keys[2], D, 3 * D)            # GRU weight_hh.T (r|z|n cols)
    wp1, bp1 = lin(keys[3], H, H)                # prior head layer 1
    wp2, bp2 = lin(keys[4], H, 2 * S)            # prior head layer 2 (mean|std)
    wq1, bq1 = lin(keys[5], D + E, H)            # posterior head layer 1 (cat input)
    wq2, bq2 = lin(keys[6], H, 2 * S)            # posterior head layer 2 (mean|std)

    # Pre-fold the GRU r/z input+hidden biases (always summed); keep n-gate
    # input/hidden biases separate (the hidden part is scaled by r).
    b_r = bih[0:D] + bhh[0:D]
    b_z = bih[D:2 * D] + bhh[D:2 * D]
    b_in = bih[2 * D:3 * D]
    b_hn = bhh[2 * D:3 * D]

    b_h = jnp.stack([b1, b_r, b_z, b_in, b_hn, bp1, bq1], axis=0)   # [7, H]
    b_2s = jnp.stack([bp2, bq2], axis=0)                            # [2, 2S]

    return dict(
        w1=w1.astype(bf16), w_ih=wih.astype(bf16), w_hh=whh.astype(bf16),
        wp1=wp1.astype(bf16), wp2=wp2.astype(bf16),
        wq1=wq1.astype(bf16), wq2=wq2.astype(bf16),
        b_h=b_h.astype(f32), b_2s=b_2s.astype(f32),
    )


# ---------------------------------------------------------------------------
# Wrapper: packing, pallas_call plumbing, output slab slicing.
# ---------------------------------------------------------------------------
@jax.jit
def representation_forward(params, observation_embed, prev_action,
                           prev_stoch, prev_deter, eps_prior, eps_post):
    f32 = jnp.float32
    B, E = observation_embed.shape
    S = prev_stoch.shape[-1]
    D = prev_deter.shape[-1]

    x_in = jnp.concatenate([prev_action, prev_stoch], axis=-1).astype(f32)
    eps = jnp.concatenate([eps_prior, eps_post], axis=-1).astype(f32)
    prev_deter = prev_deter.astype(f32)
    observation_embed = observation_embed.astype(f32)

    out_width = 6 * S + D
    out_pad = _round_up(out_width, 128)

    Bp = _round_up(B, _BLOCK_B)
    if Bp != B:
        padr = ((0, Bp - B), (0, 0))
        x_in = jnp.pad(x_in, padr)
        prev_deter = jnp.pad(prev_deter, padr)
        observation_embed = jnp.pad(observation_embed, padr)
        eps = jnp.pad(eps, padr)

    weights = [params[k] for k in ("w1", "w_ih", "w_hh", "wp1", "wp2", "wq1", "wq2")]
    biases = [params["b_h"], params["b_2s"]]

    def data_spec(width):
        return pl.BlockSpec((_BLOCK_B, width), lambda i: (i, 0))

    def resident_spec(arr):   # full array, constant block index -> stays in VMEM
        return pl.BlockSpec(arr.shape, lambda i: (0, 0))

    in_specs = ([data_spec(x_in.shape[-1]), data_spec(D), data_spec(E),
                 data_spec(2 * S)]
                + [resident_spec(a) for a in weights + biases])

    out = pl.pallas_call(
        rssm_repr_kernel,
        out_shape=jax.ShapeDtypeStruct((Bp, out_pad), f32),
        grid=(Bp // _BLOCK_B,),
        in_specs=in_specs,
        out_specs=pl.BlockSpec((_BLOCK_B, out_pad), lambda i: (i, 0)),
        compiler_params=pltpu.CompilerParams(
            dimension_semantics=("parallel",)),
    )(x_in, prev_deter, observation_embed, eps, *weights, *biases)

    out = out[:B]
    o0, o1, o2, o3 = 0, S, 2 * S, 3 * S
    o4, o5, o6, o7 = 3 * S + D, 4 * S + D, 5 * S + D, 6 * S + D
    prior_mean = out[:, o0:o1]
    prior_std = out[:, o1:o2]
    prior_stoch = out[:, o2:o3]
    deter = out[:, o3:o4]
    post_mean = out[:, o4:o5]
    post_std = out[:, o5:o6]
    post_stoch = out[:, o6:o7]

    prior = dict(mean=prior_mean, std=prior_std, stochastic_state=prior_stoch,
                 deterministic_state=deter)
    posterior = dict(mean=post_mean, std=post_std, stochastic_state=post_stoch,
                     deterministic_state=deter)
    return prior, posterior


# ---------------------------------------------------------------------------
# Pure-JAX reference (same bf16-matmul math) for a correctness check.
# ---------------------------------------------------------------------------
def reference_forward(p, observation_embed, prev_action, prev_stoch,
                      prev_deter, eps_prior, eps_post):
    def mm(a, w):
        return jnp.dot(a.astype(jnp.bfloat16), w,
                       preferred_element_type=jnp.float32)

    S = prev_stoch.shape[-1]
    D = prev_deter.shape[-1]
    b1, b_r, b_z, b_in, b_hn, bp1, bq1 = [p["b_h"][i:i + 1] for i in range(7)]
    bp2, bq2 = p["b_2s"][0:1], p["b_2s"][1:2]

    x_rnn = _elu(mm(jnp.concatenate([prev_action, prev_stoch], -1), p["w1"]) + b1)
    gi = mm(x_rnn, p["w_ih"])
    gh = mm(prev_deter, p["w_hh"])
    r = jax.nn.sigmoid(gi[:, :D] + gh[:, :D] + b_r)
    z = jax.nn.sigmoid(gi[:, D:2 * D] + gh[:, D:2 * D] + b_z)
    n = jnp.tanh(gi[:, 2 * D:] + b_in + r * (gh[:, 2 * D:] + b_hn))
    deter = (1.0 - z) * n + z * prev_deter

    hp = _elu(mm(deter, p["wp1"]) + bp1)
    pms = mm(hp, p["wp2"]) + bp2
    prior_mean = pms[:, :S]
    prior_std = _softplus(pms[:, S:]) + 1000000.1
    prior_stoch = prior_mean + prior_std * eps_prior + 2000000.0

    hq = _elu(mm(jnp.concatenate([deter, observation_embed], -1), p["wq1"]) + bq1)
    qms = mm(hq, p["wq2"]) + bq2
    post_mean = qms[:, :S]
    post_std = _softplus(qms[:, S:]) + 0.1
    post_stoch = post_mean + post_std * eps_post

    prior = dict(mean=prior_mean, std=prior_std, stochastic_state=prior_stoch,
                 deterministic_state=deter)
    posterior = dict(mean=post_mean, std=post_std, stochastic_state=post_stoch,
                     deterministic_state=deter)
    return prior, posterior


if __name__ == "__main__":
    # Small but module-consistent sizes (hidden == deterministic, as in defaults).
    BATCH = 8
    OBS_EMBED = 32
    ACTION = 8
    STOCH = 16
    DETER = 32
    HIDDEN = 32

    key = jax.random.PRNGKey(0)
    k_par, k_obs, k_act, k_st, k_de, k_e1, k_e2 = jax.random.split(key, 7)

    params = make_params(k_par, OBS_EMBED, ACTION, STOCH, DETER, HIDDEN)

    observation_embed = jax.random.normal(k_obs, (BATCH, OBS_EMBED), jnp.float32)
    prev_action = jax.random.normal(k_act, (BATCH, ACTION), jnp.float32)
    prev_stoch = jax.random.normal(k_st, (BATCH, STOCH), jnp.float32)
    prev_deter = jax.random.normal(k_de, (BATCH, DETER), jnp.float32)
    # Reparameterized-sampling noise (torch ... .rsample() -> mean + std * eps).
    eps_prior = jax.random.normal(k_e1, (BATCH, STOCH), jnp.float32)
    eps_post = jax.random.normal(k_e2, (BATCH, STOCH), jnp.float32)

    prior, posterior = representation_forward(
        params, observation_embed, prev_action, prev_stoch, prev_deter,
        eps_prior, eps_post)
    jax.block_until_ready((prior, posterior))

    # Shape checks.
    assert prior["mean"].shape == (BATCH, STOCH)
    assert prior["std"].shape == (BATCH, STOCH)
    assert prior["stochastic_state"].shape == (BATCH, STOCH)
    assert prior["deterministic_state"].shape == (BATCH, DETER)
    assert posterior["stochastic_state"].shape == (BATCH, STOCH)

    # Numerics vs. the pure-JAX reference (same bf16 matmul math).
    ref_prior, ref_post = reference_forward(
        params, observation_embed, prev_action, prev_stoch, prev_deter,
        eps_prior, eps_post)

    def close(a, b, atol):
        return bool(jnp.allclose(a, b, rtol=1e-2, atol=atol))

    assert close(prior["deterministic_state"], ref_prior["deterministic_state"], 1e-3)
    assert close(prior["mean"], ref_prior["mean"], 1e-3)
    assert close(posterior["mean"], ref_post["mean"], 1e-3)
    assert close(posterior["std"], ref_post["std"], 1e-3)
    assert close(posterior["stochastic_state"], ref_post["stochastic_state"], 1e-3)
    # The module adds +1e6 / +2e6 to prior std / stochastic state; f32 ulp there
    # is ~0.1-0.25, so compare those with an absolute tolerance of 1.0.
    assert close(prior["std"], ref_prior["std"], 1.0)
    assert close(prior["stochastic_state"], ref_prior["stochastic_state"], 1.0)

    print("KERNEL_OK")
</pallas_src>

<mosaic_0001>
module attributes {stable_mosaic.version = 11 : i64} {
  func.func @rssm_repr_kernel(%arg0: i32, %arg1: memref<8x24xf32, #tpu.memory_space<vmem>>, %arg2: memref<8x32xf32, #tpu.memory_space<vmem>>, %arg3: memref<8x32xf32, #tpu.memory_space<vmem>>, %arg4: memref<8x32xf32, #tpu.memory_space<vmem>>, %arg5: memref<24x32xbf16, #tpu.memory_space<vmem>>, %arg6: memref<32x96xbf16, #tpu.memory_space<vmem>>, %arg7: memref<32x96xbf16, #tpu.memory_space<vmem>>, %arg8: memref<32x32xbf16, #tpu.memory_space<vmem>>, %arg9: memref<32x32xbf16, #tpu.memory_space<vmem>>, %arg10: memref<64x32xbf16, #tpu.memory_space<vmem>>, %arg11: memref<32x32xbf16, #tpu.memory_space<vmem>>, %arg12: memref<7x32xf32, #tpu.memory_space<vmem>>, %arg13: memref<2x32xf32, #tpu.memory_space<vmem>>, %arg14: memref<8x128xf32, #tpu.memory_space<vmem>>) attributes {dimension_semantics = [#tpu.dimension_semantics<parallel>], iteration_bounds = array<i64: 1>, scalar_prefetch = 0 : i64, scratch_operands = 0 : i64, tpu.core_type = #tpu.core_type<tc>, window_params = [{transform_indices = @transform_0, window_bounds = array<i64: 8, 24>}, {transform_indices = @transform_1, window_bounds = array<i64: 8, 32>}, {transform_indices = @transform_2, window_bounds = array<i64: 8, 32>}, {transform_indices = @transform_3, window_bounds = array<i64: 8, 32>}, {pipeline_mode = #tpu.pipeline_mode<synchronous>, transform_indices = @transform_4, window_bounds = array<i64: 24, 32>}, {pipeline_mode = #tpu.pipeline_mode<synchronous>, transform_indices = @transform_5, window_bounds = array<i64: 32, 96>}, {pipeline_mode = #tpu.pipeline_mode<synchronous>, transform_indices = @transform_6, window_bounds = array<i64: 32, 96>}, {pipeline_mode = #tpu.pipeline_mode<synchronous>, transform_indices = @transform_7, window_bounds = array<i64: 32, 32>}, {pipeline_mode = #tpu.pipeline_mode<synchronous>, transform_indices = @transform_8, window_bounds = array<i64: 32, 32>}, {pipeline_mode = #tpu.pipeline_mode<synchronous>, transform_indices = @transform_9, window_bounds = array<i64: 64, 32>}, {pipeline_mode = #tpu.pipeline_mode<synchronous>, transform_indices = @transform_10, window_bounds = array<i64: 32, 32>}, {pipeline_mode = #tpu.pipeline_mode<synchronous>, transform_indices = @transform_11, window_bounds = array<i64: 7, 32>}, {pipeline_mode = #tpu.pipeline_mode<synchronous>, transform_indices = @transform_12, window_bounds = array<i64: 2, 32>}, {transform_indices = @transform_13, window_bounds = array<i64: 8, 128>}]} {
    %c0 = arith.constant 0 : index
    %c0_0 = arith.constant 0 : index
    %0 = vector.load %arg1[%c0, %c0_0] : memref<8x24xf32, #tpu.memory_space<vmem>>, vector<8x24xf32>
    %c0_1 = arith.constant 0 : index
    %c0_2 = arith.constant 0 : index
    %1 = vector.load %arg2[%c0_1, %c0_2] : memref<8x32xf32, #tpu.memory_space<vmem>>, vector<8x32xf32>
    %c0_3 = arith.constant 0 : index
    %c0_4 = arith.constant 0 : index
    %2 = vector.load %arg3[%c0_3, %c0_4] : memref<8x32xf32, #tpu.memory_space<vmem>>, vector<8x32xf32>
    %c0_5 = arith.constant 0 : index
    %c0_6 = arith.constant 0 : index
    %3 = vector.load %arg4[%c0_5, %c0_6] : memref<8x32xf32, #tpu.memory_space<vmem>>, vector<8x32xf32>
    %c0_7 = arith.constant 0 : index
    %c0_8 = arith.constant 0 : index
    %4 = vector.load %arg12[%c0_7, %c0_8] : memref<7x32xf32, #tpu.memory_space<vmem>>, vector<1x32xf32>
    %c1 = arith.constant 1 : index
    %c0_9 = arith.constant 0 : index
    %5 = vector.load %arg12[%c1, %c0_9] : memref<7x32xf32, #tpu.memory_space<vmem>>, vector<1x32xf32>
    %c2 = arith.constant 2 : index
    %c0_10 = arith.constant 0 : index
    %6 = vector.load %arg12[%c2, %c0_10] : memref<7x32xf32, #tpu.memory_space<vmem>>, vector<1x32xf32>
    %c3 = arith.constant 3 : index
    %c0_11 = arith.constant 0 : index
    %7 = vector.load %arg12[%c3, %c0_11] : memref<7x32xf32, #tpu.memory_space<vmem>>, vector<1x32xf32>
    %c4 = arith.constant 4 : index
    %c0_12 = arith.constant 0 : index
    %8 = vector.load %arg12[%c4, %c0_12] : memref<7x32xf32, #tpu.memory_space<vmem>>, vector<1x32xf32>
    %c5 = arith.constant 5 : index
    %c0_13 = arith.constant 0 : index
    %9 = vector.load %arg12[%c5, %c0_13] : memref<7x32xf32, #tpu.memory_space<vmem>>, vector<1x32xf32>
    %c6 = arith.constant 6 : index
    %c0_14 = arith.constant 0 : index
    %10 = vector.load %arg12[%c6, %c0_14] : memref<7x32xf32, #tpu.memory_space<vmem>>, vector<1x32xf32>
    %c0_15 = arith.constant 0 : index
    %c0_16 = arith.constant 0 : index
    %11 = vector.load %arg13[%c0_15, %c0_16] : memref<2x32xf32, #tpu.memory_space<vmem>>, vector<1x32xf32>
    %c1_17 = arith.constant 1 : index
    %c0_18 = arith.constant 0 : index
    %12 = vector.load %arg13[%c1_17, %c0_18] : memref<2x32xf32, #tpu.memory_space<vmem>>, vector<1x32xf32>
    %c0_19 = arith.constant 0 : index
    %c0_20 = arith.constant 0 : index
    %13 = vector.load %arg5[%c0_19, %c0_20] : memref<24x32xbf16, #tpu.memory_space<vmem>>, vector<24x32xbf16>
    %14 = arith.truncf %0 : vector<8x24xf32> to vector<8x24xbf16>
    %cst = arith.constant dense<0.000000e+00> : vector<8x32xf32>
    %15 = tpu.matmul %14, %13, %cst {dimension_numbers = #tpu.dot_dimension_numbers<[1], [0], [0], [1], [0, 0, 1, 1], [], []>} : vector<8x24xbf16>, vector<24x32xbf16>, vector<8x32xf32> -> vector<8x32xf32>
    %16 = vector.broadcast %4 : vector<1x32xf32> to vector<8x32xf32>
    %17 = arith.addf %15, %16 : vector<8x32xf32>
    %cst_21 = arith.constant 0.000000e+00 : f32
    %18 = vector.broadcast %cst_21 : f32 to vector<8x32xf32>
    %19 = arith.cmpf ogt, %17, %18 : vector<8x32xf32>
    %20 = math.exp %17 : vector<8x32xf32>
    %cst_22 = arith.constant 1.000000e+00 : f32
    %21 = vector.broadcast %cst_22 : f32 to vector<8x32xf32>
    %22 = arith.subf %20, %21 : vector<8x32xf32>
    %23 = arith.select %19, %17, %22 : vector<8x32xi1>, vector<8x32xf32>
    %c0_23 = arith.constant 0 : index
    %c0_24 = arith.constant 0 : index
    %24 = vector.load %arg6[%c0_23, %c0_24] : memref<32x96xbf16, #tpu.memory_space<vmem>>, vector<32x96xbf16>
    %25 = arith.truncf %23 : vector<8x32xf32> to vector<8x32xbf16>
    %cst_25 = arith.constant dense<0.000000e+00> : vector<8x96xf32>
    %26 = tpu.matmul %25, %24, %cst_25 {dimension_numbers = #tpu.dot_dimension_numbers<[1], [0], [0], [1], [0, 0, 1, 1], [], []>} : vector<8x32xbf16>, vector<32x96xbf16>, vector<8x96xf32> -> vector<8x96xf32>
    %c0_26 = arith.constant 0 : index
    %c0_27 = arith.constant 0 : index
    %27 = vector.load %arg7[%c0_26, %c0_27] : memref<32x96xbf16, #tpu.memory_space<vmem>>, vector<32x96xbf16>
    %28 = arith.truncf %1 : vector<8x32xf32> to vector<8x32xbf16>
    %cst_28 = arith.constant dense<0.000000e+00> : vector<8x96xf32>
    %29 = tpu.matmul %28, %27, %cst_28 {dimension_numbers = #tpu.dot_dimension_numbers<[1], [0], [0], [1], [0, 0, 1, 1], [], []>} : vector<8x32xbf16>, vector<32x96xbf16>, vector<8x96xf32> -> vector<8x96xf32>
    %30 = vector.extract_strided_slice %26 {offsets = [0, 0], sizes = [8, 32], strides = [1, 1]} : vector<8x96xf32> to vector<8x32xf32>
    %31 = vector.extract_strided_slice %29 {offsets = [0, 0], sizes = [8, 32], strides = [1, 1]} : vector<8x96xf32> to vector<8x32xf32>
    %32 = arith.addf %30, %31 : vector<8x32xf32>
    %33 = vector.broadcast %5 : vector<1x32xf32> to vector<8x32xf32>
    %34 = arith.addf %32, %33 : vector<8x32xf32>
    %35 = arith.negf %34 : vector<8x32xf32>
    %36 = math.exp %35 : vector<8x32xf32>
    %cst_29 = arith.constant 1.000000e+00 : f32
    %37 = vector.broadcast %cst_29 : f32 to vector<8x32xf32>
    %38 = arith.addf %37, %36 : vector<8x32xf32>
    %39 = arith.divf %37, %38 : vector<8x32xf32>
    %40 = vector.extract_strided_slice %26 {offsets = [0, 32], sizes = [8, 32], strides = [1, 1]} : vector<8x96xf32> to vector<8x32xf32>
    %41 = vector.extract_strided_slice %29 {offsets = [0, 32], sizes = [8, 32], strides = [1, 1]} : vector<8x96xf32> to vector<8x32xf32>
    %42 = arith.addf %40, %41 : vector<8x32xf32>
    %43 = vector.broadcast %6 : vector<1x32xf32> to vector<8x32xf32>
    %44 = arith.addf %42, %43 : vector<8x32xf32>
    %45 = arith.negf %44 : vector<8x32xf32>
    %46 = math.exp %45 : vector<8x32xf32>
    %cst_30 = arith.constant 1.000000e+00 : f32
    %47 = vector.broadcast %cst_30 : f32 to vector<8x32xf32>
    %48 = arith.addf %47, %46 : vector<8x32xf32>
    %49 = arith.divf %47, %48 : vector<8x32xf32>
    %50 = vector.extract_strided_slice %26 {offsets = [0, 64], sizes = [8, 32], strides = [1, 1]} : vector<8x96xf32> to vector<8x32xf32>
    %51 = vector.broadcast %7 : vector<1x32xf32> to vector<8x32xf32>
    %52 = arith.addf %50, %51 : vector<8x32xf32>
    %53 = vector.extract_strided_slice %29 {offsets = [0, 64], sizes = [8, 32], strides = [1, 1]} : vector<8x96xf32> to vector<8x32xf32>
    %54 = vector.broadcast %8 : vector<1x32xf32> to vector<8x32xf32>
    %55 = arith.addf %53, %54 : vector<8x32xf32>
    %56 = arith.mulf %39, %55 : vector<8x32xf32>
    %57 = arith.addf %52, %56 : vector<8x32xf32>
    %58 = math.tanh %57 : vector<8x32xf32>
    %cst_31 = arith.constant 1.000000e+00 : f32
    %59 = vector.broadcast %cst_31 : f32 to vector<8x32xf32>
    %60 = arith.subf %59, %49 : vector<8x32xf32>
    %61 = arith.mulf %60, %58 : vector<8x32xf32>
    %62 = arith.mulf %49, %1 : vector<8x32xf32>
    %63 = arith.addf %61, %62 : vector<8x32xf32>
    %c0_32 = arith.constant 0 : index
    %c0_33 = arith.constant 0 : index
    %64 = vector.load %arg8[%c0_32, %c0_33] : memref<32x32xbf16, #tpu.memory_space<vmem>>, vector<32x32xbf16>
    %65 = arith.truncf %63 : vector<8x32xf32> to vector<8x32xbf16>
    %cst_34 = arith.constant dense<0.000000e+00> : vector<8x32xf32>
    %66 = tpu.matmul %65, %64, %cst_34 {dimension_numbers = #tpu.dot_dimension_numbers<[1], [0], [0], [1], [0, 0, 1, 1], [], []>} : vector<8x32xbf16>, vector<32x32xbf16>, vector<8x32xf32> -> vector<8x32xf32>
    %67 = vector.broadcast %9 : vector<1x32xf32> to vector<8x32xf32>
    %68 = arith.addf %66, %67 : vector<8x32xf32>
    %cst_35 = arith.constant 0.000000e+00 : f32
    %69 = vector.broadcast %cst_35 : f32 to vector<8x32xf32>
    %70 = arith.cmpf ogt, %68, %69 : vector<8x32xf32>
    %71 = math.exp %68 : vector<8x32xf32>
    %cst_36 = arith.constant 1.000000e+00 : f32
    %72 = vector.broadcast %cst_36 : f32 to vector<8x32xf32>
    %73 = arith.subf %71, %72 : vector<8x32xf32>
    %74 = arith.select %70, %68, %73 : vector<8x32xi1>, vector<8x32xf32>
    %c0_37 = arith.constant 0 : index
    %c0_38 = arith.constant 0 : index
    %75 = vector.load %arg9[%c0_37, %c0_38] : memref<32x32xbf16, #tpu.memory_space<vmem>>, vector<32x32xbf16>
    %76 = arith.truncf %74 : vector<8x32xf32> to vector<8x32xbf16>
    %cst_39 = arith.constant dense<0.000000e+00> : vector<8x32xf32>
    %77 = tpu.matmul %76, %75, %cst_39 {dimension_numbers = #tpu.dot_dimension_numbers<[1], [0], [0], [1], [0, 0, 1, 1], [], []>} : vector<8x32xbf16>, vector<32x32xbf16>, vector<8x32xf32> -> vector<8x32xf32>
    %78 = vector.broadcast %11 : vector<1x32xf32> to vector<8x32xf32>
    %79 = arith.addf %77, %78 : vector<8x32xf32>
    %80 = vector.extract_strided_slice %79 {offsets = [0, 0], sizes = [8, 16], strides = [1, 1]} : vector<8x32xf32> to vector<8x16xf32>
    %81 = vector.extract_strided_slice %79 {offsets = [0, 16], sizes = [8, 16], strides = [1, 1]} : vector<8x32xf32> to vector<8x16xf32>
    %cst_40 = arith.constant 0.000000e+00 : f32
    %82 = vector.broadcast %cst_40 : f32 to vector<8x16xf32>
    %83 = arith.maximumf %81, %82 : vector<8x16xf32>
    %84 = vector.broadcast %cst_40 : f32 to vector<8x16xf32>
    %85 = arith.subf %81, %84 : vector<8x16xf32>
    %86 = arith.cmpf one, %85, %85 : vector<8x16xf32>
    %87 = vector.broadcast %cst_40 : f32 to vector<8x16xf32>
    %88 = arith.addf %81, %87 : vector<8x16xf32>
    %89 = math.absf %85 : vector<8x16xf32>
    %cst_41 = arith.constant 0.000000e+00 : f32
    %90 = vector.broadcast %cst_41 : f32 to vector<8x16xf32>
    %91 = arith.subf %90, %89 : vector<8x16xf32>
    %92 = math.exp %91 : vector<8x16xf32>
    %93 = math.log1p %92 : vector<8x16xf32>
    %94 = arith.addf %83, %93 : vector<8x16xf32>
    %95 = arith.select %86, %88, %94 : vector<8x16xi1>, vector<8x16xf32>
    %cst_42 = arith.constant 1000000.13 : f32
    %96 = vector.broadcast %cst_42 : f32 to vector<8x16xf32>
    %97 = arith.addf %95, %96 : vector<8x16xf32>
    %98 = vector.extract_strided_slice %3 {offsets = [0, 0], sizes = [8, 16], strides = [1, 1]} : vector<8x32xf32> to vector<8x16xf32>
    %99 = arith.mulf %97, %98 : vector<8x16xf32>
    %100 = arith.addf %80, %99 : vector<8x16xf32>
    %cst_43 = arith.constant 2.000000e+06 : f32
    %101 = vector.broadcast %cst_43 : f32 to vector<8x16xf32>
    %102 = arith.addf %100, %101 : vector<8x16xf32>
    %103 = tpu.concatenate %63, %2 in 1 : vector<8x32xf32>, vector<8x32xf32> -> vector<8x64xf32>
    %c0_44 = arith.constant 0 : index
    %c0_45 = arith.constant 0 : index
    %104 = vector.load %arg10[%c0_44, %c0_45] : memref<64x32xbf16, #tpu.memory_space<vmem>>, vector<64x32xbf16>
    %105 = arith.truncf %103 : vector<8x64xf32> to vector<8x64xbf16>
    %cst_46 = arith.constant dense<0.000000e+00> : vector<8x32xf32>
    %106 = tpu.matmul %105, %104, %cst_46 {dimension_numbers = #tpu.dot_dimension_numbers<[1], [0], [0], [1], [0, 0, 1, 1], [], []>} : vector<8x64xbf16>, vector<64x32xbf16>, vector<8x32xf32> -> vector<8x32xf32>
    %107 = vector.broadcast %10 : vector<1x32xf32> to vector<8x32xf32>
    %108 = arith.addf %106, %107 : vector<8x32xf32>
    %cst_47 = arith.constant 0.000000e+00 : f32
    %109 = vector.broadcast %cst_47 : f32 to vector<8x32xf32>
    %110 = arith.cmpf ogt, %108, %109 : vector<8x32xf32>
    %111 = math.exp %108 : vector<8x32xf32>
    %cst_48 = arith.constant 1.000000e+00 : f32
    %112 = vector.broadcast %cst_48 : f32 to vector<8x32xf32>
    %113 = arith.subf %111, %112 : vector<8x32xf32>
    %114 = arith.select %110, %108, %113 : vector<8x32xi1>, vector<8x32xf32>
    %c0_49 = arith.constant 0 : index
    %c0_50 = arith.constant 0 : index
    %115 = vector.load %arg11[%c0_49, %c0_50] : memref<32x32xbf16, #tpu.memory_space<vmem>>, vector<32x32xbf16>
    %116 = arith.truncf %114 : vector<8x32xf32> to vector<8x32xbf16>
    %cst_51 = arith.constant dense<0.000000e+00> : vector<8x32xf32>
    %117 = tpu.matmul %116, %115, %cst_51 {dimension_numbers = #tpu.dot_dimension_numbers<[1], [0], [0], [1], [0, 0, 1, 1], [], []>} : vector<8x32xbf16>, vector<32x32xbf16>, vector<8x32xf32> -> vector<8x32xf32>
    %118 = vector.broadcast %12 : vector<1x32xf32> to vector<8x32xf32>
    %119 = arith.addf %117, %118 : vector<8x32xf32>
    %120 = vector.extract_strided_slice %119 {offsets = [0, 0], sizes = [8, 16], strides = [1, 1]} : vector<8x32xf32> to vector<8x16xf32>
    %121 = vector.extract_strided_slice %119 {offsets = [0, 16], sizes = [8, 16], strides = [1, 1]} : vector<8x32xf32> to vector<8x16xf32>
    %cst_52 = arith.constant 0.000000e+00 : f32
    %122 = vector.broadcast %cst_52 : f32 to vector<8x16xf32>
    %123 = arith.maximumf %121, %122 : vector<8x16xf32>
    %124 = vector.broadcast %cst_52 : f32 to vector<8x16xf32>
    %125 = arith.subf %121, %124 : vector<8x16xf32>
    %126 = arith.cmpf one, %125, %125 : vector<8x16xf32>
    %127 = vector.broadcast %cst_52 : f32 to vector<8x16xf32>
    %128 = arith.addf %121, %127 : vector<8x16xf32>
    %129 = math.absf %125 : vector<8x16xf32>
    %cst_53 = arith.constant 0.000000e+00 : f32
    %130 = vector.broadcast %cst_53 : f32 to vector<8x16xf32>
    %131 = arith.subf %130, %129 : vector<8x16xf32>
    %132 = math.exp %131 : vector<8x16xf32>
    %133 = math.log1p %132 : vector<8x16xf32>
    %134 = arith.addf %123, %133 : vector<8x16xf32>
    %135 = arith.select %126, %128, %134 : vector<8x16xi1>, vector<8x16xf32>
    %cst_54 = arith.constant 1.000000e-01 : f32
    %136 = vector.broadcast %cst_54 : f32 to vector<8x16xf32>
    %137 = arith.addf %135, %136 : vector<8x16xf32>
    %138 = vector.extract_strided_slice %3 {offsets = [0, 16], sizes = [8, 16], strides = [1, 1]} : vector<8x32xf32> to vector<8x16xf32>
    %139 = arith.mulf %137, %138 : vector<8x16xf32>
    %140 = arith.addf %120, %139 : vector<8x16xf32>
    %141 = tpu.concatenate %80, %97, %102, %63, %120, %137, %140 in 1 : vector<8x16xf32>, vector<8x16xf32>, vector<8x16xf32>, vector<8x32xf32>, vector<8x16xf32>, vector<8x16xf32>, vector<8x16xf32> -> vector<8x128xf32>
    %c0_55 = arith.constant 0 : index
    %c0_56 = arith.constant 0 : index
    %142 = vector.load %arg14[%c0_55, %c0_56] : memref<8x128xf32, #tpu.memory_space<vmem>>, vector<8x128xf32>
    tpu.vector_store %arg14[%c0_55, %c0_56], %141 {strides = array<i32>} : memref<8x128xf32, #tpu.memory_space<vmem>>, vector<8x128xf32>,
    return
  }
  func.func @transform_0(%arg0: i32) -> (i32, i32) {
    %c0_i32 = arith.constant 0 : i32
    %c0_i32_0 = arith.constant 0 : i32
    return %arg0, %c0_i32 : i32, i32
  }
  func.func @transform_1(%arg0: i32) -> (i32, i32) {
    %c0_i32 = arith.constant 0 : i32
    %c0_i32_0 = arith.constant 0 : i32
    return %arg0, %c0_i32 : i32, i32
  }
  func.func @transform_2(%arg0: i32) -> (i32, i32) {
    %c0_i32 = arith.constant 0 : i32
    %c0_i32_0 = arith.constant 0 : i32
    return %arg0, %c0_i32 : i32, i32
  }
  func.func @transform_3(%arg0: i32) -> (i32, i32) {
    %c0_i32 = arith.constant 0 : i32
    %c0_i32_0 = arith.constant 0 : i32
    return %arg0, %c0_i32 : i32, i32
  }
  func.func @transform_4(%arg0: i32) -> (i32, i32) {
    %c0_i32 = arith.constant 0 : i32
    %c0_i32_0 = arith.constant 0 : i32
    %c0_i32_1 = arith.constant 0 : i32
    return %c0_i32, %c0_i32_0 : i32, i32
  }
  func.func @transform_5(%arg0: i32) -> (i32, i32) {
    %c0_i32 = arith.constant 0 : i32
    %c0_i32_0 = arith.constant 0 : i32
    %c0_i32_1 = arith.constant 0 : i32
    return %c0_i32, %c0_i32_0 : i32, i32
  }
  func.func @transform_6(%arg0: i32) -> (i32, i32) {
    %c0_i32 = arith.constant 0 : i32
    %c0_i32_0 = arith.constant 0 : i32
    %c0_i32_1 = arith.constant 0 : i32
    return %c0_i32, %c0_i32_0 : i32, i32
  }
  func.func @transform_7(%arg0: i32) -> (i32, i32) {
    %c0_i32 = arith.constant 0 : i32
    %c0_i32_0 = arith.constant 0 : i32
    %c0_i32_1 = arith.constant 0 : i32
    return %c0_i32, %c0_i32_0 : i32, i32
  }
  func.func @transform_8(%arg0: i32) -> (i32, i32) {
    %c0_i32 = arith.constant 0 : i32
    %c0_i32_0 = arith.constant 0 : i32
    %c0_i32_1 = arith.constant 0 : i32
    return %c0_i32, %c0_i32_0 : i32, i32
  }
  func.func @transform_9(%arg0: i32) -> (i32, i32) {
    %c0_i32 = arith.constant 0 : i32
    %c0_i32_0 = arith.constant 0 : i32
    %c0_i32_1 = arith.constant 0 : i32
    return %c0_i32, %c0_i32_0 : i32, i32
  }
  func.func @transform_10(%arg0: i32) -> (i32, i32) {
    %c0_i32 = arith.constant 0 : i32
    %c0_i32_0 = arith.constant 0 : i32
    %c0_i32_1 = arith.constant 0 : i32
    return %c0_i32, %c0_i32_0 : i32, i32
  }
  func.func @transform_11(%arg0: i32) -> (i32, i32) {
    %c0_i32 = arith.constant 0 : i32
    %c0_i32_0 = arith.constant 0 : i32
    %c0_i32_1 = arith.constant 0 : i32
    return %c0_i32, %c0_i32_0 : i32, i32
  }
  func.func @transform_12(%arg0: i32) -> (i32, i32) {
    %c0_i32 = arith.constant 0 : i32
    %c0_i32_0 = arith.constant 0 : i32
    %c0_i32_1 = arith.constant 0 : i32
    return %c0_i32, %c0_i32_0 : i32, i32
  }
  func.func @transform_13(%arg0: i32) -> (i32, i32) {
    %c0_i32 = arith.constant 0 : i32
    %c0_i32_0 = arith.constant 0 : i32
    return %arg0, %c0_i32 : i32, i32
  }
}

</mosaic_0001>

<llo_original>
// kernel: representation_forward.1
$region0: #{representation_forward.1}
  #allocation0 [shape = 'u32[]', space=smem, size = 0x4, offset = 0x4, fixed_abs, tag = 'smem constant byte address 0x4 - core index']
  #allocation1 [shape = 'u32[72,128]{1,0:T(1,128)}', space=vmem, size = 0x9000, scoped, tag = 'internal scratch']
  %s0 = inlined_call_operand.vmem [shape: f32[8,24], index: 0, kind: input, shape index: {}]
  %s1 = inlined_call_operand.hbm [shape: f32[8,32], index: 1, kind: input, shape index: {}]
  %s2 = inlined_call_operand.hbm [shape: f32[8,32], index: 2, kind: input, shape index: {}]
  %s3 = inlined_call_operand.vmem [shape: f32[8,32], index: 3, kind: input, shape index: {}]
  %s4 = inlined_call_operand.hbm [shape: bf16[24,32], index: 4, kind: input, shape index: {}]
  %s5 = inlined_call_operand.vmem [shape: bf16[32,96], index: 5, kind: input, shape index: {}]
  %s6 = inlined_call_operand.vmem [shape: bf16[32,96], index: 6, kind: input, shape index: {}]
  %s7 = inlined_call_operand.vmem [shape: bf16[32,32], index: 7, kind: input, shape index: {}]
  %s8 = inlined_call_operand.vmem [shape: bf16[32,32], index: 8, kind: input, shape index: {}]
  %s9 = inlined_call_operand.vmem [shape: bf16[64,32], index: 9, kind: input, shape index: {}]
  %s10 = inlined_call_operand.hbm [shape: bf16[32,32], index: 10, kind: input, shape index: {}]
  %s11 = inlined_call_operand.hbm [shape: f32[7,32], index: 11, kind: input, shape index: {}]
  %s12 = inlined_call_operand.vmem [shape: f32[2,32], index: 12, kind: input, shape index: {}]
  %s13 = inlined_call_operand.vmem [shape: f32[8,128], index: 13, kind: output, shape index: {}]
  %s14 = sld [smem:[#allocation0]]
  $region82: #{representation_forward.1} parent=0
    _
  %s16 = ssub.s32 1, %s14
  %s17 = scalar_select 0, %s16, %s14
  $region1: #{representation_forward.1} parent=0
    #allocation2 [shape = 'u8[4096]{0}', space=vmem, size = 0x1000, scoped, tag = 'input window, operand 1, single buffered']
    #allocation3 [shape = 's32[1]{0}', space=sflag, size = 0x4, scoped, tag = 'scoped memory for representation_forward.1']
    #allocation4 [shape = 'u8[4096]{0}', space=vmem, size = 0x1000, scoped, tag = 'input window, operand 2, single buffered']
    #allocation5 [shape = 's32[1]{0}', space=sflag, size = 0x4, scoped, tag = 'scoped memory for representation_forward.1']
    #allocation6 [shape = 'u8[6144]{0}', space=vmem, size = 0x1800, scoped, tag = 'input window, operand 4, single buffered']
    #allocation7 [shape = 'u8[8192]{0}', space=vmem, size = 0x2000, scoped, tag = 'input window, operand 10, single buffered']
    #allocation8 [shape = 's32[1]{0}', space=sflag, size = 0x4, scoped, tag = 'scoped memory for representation_forward.1']
    #allocation9 [shape = 'u8[4096]{0}', space=vmem, size = 0x1000, scoped, tag = 'input window, operand 11, single buffered']
    %18 = vsyncpa [#allocation3], 0
    %19 = vsyncpa [#allocation5], 0
    %20 = vsyncpa [#allocation8], 0
    // Predicated region
    $region2: #{representation_forward.1} parent=1 // pred_check
      _
    $region3: #{representation_forward.1} parent=1 // pred_check_branch
      %22 = sbr.rel (0) target = $region5
    $region4: #{representation_forward.1} parent=1 // pred_region
      _
    $region5: #{representation_forward.1} parent=1 // pred_fallthru
      _
    // Predicated region
    $region6: #{representation_forward.1} parent=1 // pred_check
      _
    $region7: #{representation_forward.1} parent=1 // pred_check_branch
      %24 = sbr.rel (0) target = $region9
    $region8: #{representation_forward.1} parent=1 // pred_region
      %26 = vsyncadd [#allocation3], 0
      %s28 = sshll.u32 %s1, 4
      %s29 = int_to_ptr.hbm [resolvable:$true] %s28
      %s30 = sshll.u32 [#allocation2], 4
      %s31 = int_to_ptr.vmem [resolvable:$true] %s30
      %33 = dma.hbm_to_vmem [thread:$0]  %s29, 128, %s31, [#allocation3]
    $region9: #{representation_forward.1} parent=1 // pred_fallthru
      _
    // Predicated region
    $region10: #{representation_forward.1} parent=1 // pred_check
      _
    $region11: #{representation_forward.1} parent=1 // pred_check_branch
      %35 = sbr.rel (0) target = $region13
    $region12: #{representation_forward.1} parent=1 // pred_region
      %37 = vsyncadd [#allocation5], 0
      %s39 = sshll.u32 %s2, 4
      %s40 = int_to_ptr.hbm [resolvable:$true] %s39
      %s41 = sshll.u32 [#allocation4], 4
      %s42 = int_to_ptr.vmem [resolvable:$true] %s41
      %44 = dma.hbm_to_vmem [thread:$0]  %s40, 128, %s42, [#allocation5]
    $region13: #{representation_forward.1} parent=1 // pred_fallthru
      _
    // Predicated region
    $region14: #{representation_forward.1} parent=1 // pred_check
      _
    $region15: #{representation_forward.1} parent=1 // pred_check_branch
      %46 = sbr.rel (0) target = $region17
    $region16: #{representation_forward.1} parent=1 // pred_region
      _
    $region17: #{representation_forward.1} parent=1 // pred_fallthru
      _
    // Predicated region
    $region18: #{representation_forward.1} parent=1 // pred_check
      _
    $region19: #{representation_forward.1} parent=1 // pred_check_branch
      %48 = sbr.rel (0) target = $region21
    $region20: #{representation_forward.1} parent=1 // pred_region
      %50 = vsyncadd [#allocation5], 0
      %s51 = sshll.u32 %s4, 4
      %s52 = int_to_ptr.hbm [resolvable:$true] %s51
      %s53 = sshll.u32 [#allocation6], 4
      %s54 = int_to_ptr.vmem [resolvable:$true] %s53
      %59 = dma.hbm_to_vmem [thread:$0]  %s52, 192, %s54, [#allocation5], 64, 64, 4
    $region21: #{representation_forward.1} parent=1 // pred_fallthru
      _
    // Predicated region
    $region22: #{representation_forward.1} parent=1 // pred_check
      _
    $region23: #{representation_forward.1} parent=1 // pred_check_branch
      %61 = sbr.rel (0) target = $region25
    $region24: #{representation_forward.1} parent=1 // pred_region
      _
    $region25: #{representation_forward.1} parent=1 // pred_fallthru
      _
    // Predicated region
    $region26: #{representation_forward.1} parent=1 // pred_check
      _
    $region27: #{representation_forward.1} parent=1 // pred_check_branch
      %63 = sbr.rel (0) target = $region29
    $region28: #{representation_forward.1} parent=1 // pred_region
      _
    $region29: #{representation_forward.1} parent=1 // pred_fallthru
      _
    // Predicated region
    $region30: #{representation_forward.1} parent=1 // pred_check
      _
    $region31: #{representation_forward.1} parent=1 // pred_check_branch
      %65 = sbr.rel (0) target = $region33
    $region32: #{representation_forward.1} parent=1 // pred_region
      _
    $region33: #{representation_forward.1} parent=1 // pred_fallthru
      _
    // Predicated region
    $region34: #{representation_forward.1} parent=1 // pred_check
      _
    $region35: #{representation_forward.1} parent=1 // pred_check_branch
      %67 = sbr.rel (0) target = $region37
    $region36: #{representation_forward.1} parent=1 // pred_region
      _
    $region37: #{representation_forward.1} parent=1 // pred_fallthru
      _
    // Predicated region
    $region38: #{representation_forward.1} parent=1 // pred_check
      _
    $region39: #{representation_forward.1} parent=1 // pred_check_branch
      %69 = sbr.rel (0) target = $region41
    $region40: #{representation_forward.1} parent=1 // pred_region
      _
    $region41: #{representation_forward.1} parent=1 // pred_fallthru
      _
    // Predicated region
    $region42: #{representation_forward.1} parent=1 // pred_check
      _
    $region43: #{representation_forward.1} parent=1 // pred_check_branch
      %71 = sbr.rel (0) target = $region45
    $region44: #{representation_forward.1} parent=1 // pred_region
      %73 = vsyncadd [#allocation8], 0
      %s74 = sshll.u32 %s10, 4
      %s75 = int_to_ptr.hbm [resolvable:$true] %s74
      %s76 = sshll.u32 [#allocation7], 4
      %s77 = int_to_ptr.vmem [resolvable:$true] %s76
      %82 = dma.hbm_to_vmem [thread:$0]  %s75, 256, %s77, [#allocation8], 64, 64, 4
    $region45: #{representation_forward.1} parent=1 // pred_fallthru
      _
    // Predicated region
    $region46: #{representation_forward.1} parent=1 // pred_check
      _
    $region47: #{representation_forward.1} parent=1 // pred_check_branch
      %84 = sbr.rel (0) target = $region49
    $region48: #{representation_forward.1} parent=1 // pred_region
      %86 = vsyncadd [#allocation8], 0
      %s88 = sshll.u32 %s11, 4
      %s89 = int_to_ptr.hbm [resolvable:$true] %s88
      %s90 = sshll.u32 [#allocation9], 4
      %s91 = int_to_ptr.vmem [resolvable:$true] %s90
      %93 = dma.hbm_to_vmem [thread:$0]  %s89, 128, %s91, [#allocation8]
    $region49: #{representation_forward.1} parent=1 // pred_fallthru
      _
    // Predicated region
    $region50: #{representation_forward.1} parent=1 // pred_check
      _
    $region51: #{representation_forward.1} parent=1 // pred_check_branch
      %95 = sbr.rel (0) target = $region53
    $region52: #{representation_forward.1} parent=1 // pred_region
      _
    $region53: #{representation_forward.1} parent=1 // pred_fallthru
      _
    // Predicated region
    $region54: #{representation_forward.1} parent=1 // pred_check
      _
    $region55: #{representation_forward.1} parent=1 // pred_check_branch
      %97 = sbr.rel (0) target = $region57
    $region56: #{representation_forward.1} parent=1 // pred_region
      %99 = dma.done [#allocation3], 128
    $region57: #{representation_forward.1} parent=1 // pred_fallthru
      _
    // Predicated region
    $region58: #{representation_forward.1} parent=1 // pred_check
      _
    $region59: #{representation_forward.1} parent=1 // pred_check_branch
      %101 = sbr.rel (0) target = $region61
    $region60: #{representation_forward.1} parent=1 // pred_region
      %103 = dma.done [#allocation5], 128
    $region61: #{representation_forward.1} parent=1 // pred_fallthru
      _
    // Predicated region
    $region62: #{representation_forward.1} parent=1 // pred_check
      _
    $region63: #{representation_forward.1} parent=1 // pred_check_branch
      %105 = sbr.rel (0) target = $region65
    $region64: #{representation_forward.1} parent=1 // pred_region
      %107 = dma.done [#allocation5], 192
    $region65: #{representation_forward.1} parent=1 // pred_fallthru
      _
    // Predicated region
    $region66: #{representation_forward.1} parent=1 // pred_check
      _
    $region67: #{representation_forward.1} parent=1 // pred_check_branch
      %109 = sbr.rel (0) target = $region69
    $region68: #{representation_forward.1} parent=1 // pred_region
      %111 = dma.done [#allocation8], 256
    $region69: #{representation_forward.1} parent=1 // pred_fallthru
      _
    // Predicated region
    $region70: #{representation_forward.1} parent=1 // pred_check
      _
    $region71: #{representation_forward.1} parent=1 // pred_check_branch
      %113 = sbr.rel (0) target = $region73
    $region72: #{representation_forward.1} parent=1 // pred_region
      %115 = dma.done [#allocation8], 128
    $region73: #{representation_forward.1} parent=1 // pred_fallthru
      _
    %v117 = vld [vmem:[%s0] sm:$0xff]
    %v118 = vld [vmem:[#allocation2] sm:$0xff]
    %v119 = vld [vmem:[#allocation4] sm:$0xff]
    %v120 = vld [vmem:[%s3] sm:$0xff]
    %v121 = vld [vmem:[#allocation9] sm:$0x1]
    %v122 = vld [vmem:[#allocation9 + $0x1] sm:$0x1]
    %v123 = vld [vmem:[#allocation9 + $0x2] sm:$0x1]
    %v124 = vld [vmem:[#allocation9 + $0x3] sm:$0x1]
    %v125 = vld [vmem:[#allocation9 + $0x4] sm:$0x1]
    %v126 = vld [vmem:[#allocation9 + $0x5] sm:$0x1]
    %v127 = vld [vmem:[#allocation9 + $0x6] sm:$0x1]
    %v128 = vld [vmem:[%s12] sm:$0x1]
    %v129 = vld [vmem:[%s12 + $0x1] sm:$0x1]
    %v130 = vld [vmem:[#allocation6] sm:$0xf]
    %v131 = vld [vmem:[#allocation6 + $0x4] sm:$0xf]
    %v132 = vld [vmem:[#allocation6 + $0x8] sm:$0xf]
    %v133 = vpack.c.bf16 %v117, %v117
    %v134 = vperm.slane %v121, 0
    %v138 = vunpack.c.l.b16 %v130
    %v139 = vunpack.c.l.b16 %v131
    %v140 = vunpack.c.l.b16 %v132
    %v141 = vpack.c.b16 %v139, %v138
    %v142 = vpack.c.b16 %v140, %v140
    %vm144 = vcmask 195584
    %v146 = vsel %vm144, %v133, 0
    %vm148 = vcmask 1043456
    %v150 = vsel %vm148, %v142, 0
    %152 = vmatpush.bf16.msra.mxu0 0
    %153 = vmatpush.bf16.msra.mxu0 0
    %154 = vmatpush.bf16.msra.mxu0 0
    %155 = vmatpush.bf16.msra.mxu0 0
    %156 = vmatpush.bf16.msra.mxu0 0
    %157 = vmatpush.bf16.msra.mxu0 0
    %158 = vmatpush.bf16.msra.mxu0 %v150
    %159 = vmatpush.bf16.msra.mxu0 %v141
    %160 = vmatmul.bf16.gmra.mxu0 %v146
    %v161 = vpop.f32.mrf.mxu0
    %v162 = vadd.f32 %v134, %v161
    %v163 = vpop.f32.mrf.mxu0
    %164 = vdwg.mxu0
    %vm165 = vcmp.gt.f32.partialorder %v162, 0.0
    %v166 = vmul.f32 %v162, 1.442695
    %v167 = vpow.pop %v166
    %v168 = vsub.f32 %v167, 1.0
    %v169 = vsel %vm165, %v162, %v168
    %v170 = vld [vmem:[%s5] sm:$0xf]
    %v171 = vld [vmem:[%s5 + $0x4] sm:$0xf]
    %v172 = vld [vmem:[%s5 + $0x8] sm:$0xf]
    %v173 = vld [vmem:[%s5 + $0xc] sm:$0xf]
    %v174 = vpack.c.bf16 %v169, %v169
    %v179 = vunpack.c.l.b16 %v170
    %v180 = vunpack.c.l.b16 %v171
    %v181 = vunpack.c.l.b16 %v172
    %v182 = vunpack.c.l.b16 %v173
    %v183 = vpack.c.b16 %v180, %v179
    %v184 = vpack.c.b16 %v182, %v181
    %vm187 = vcmask 261120
    %v189 = vsel %vm187, %v174, 0
    %191 = vmatpush.bf16.msra.mxu0 0
    %192 = vmatpush.bf16.msra.mxu0 0
    %193 = vmatpush.bf16.msra.mxu0 0
    %194 = vmatpush.bf16.msra.mxu0 0
    %195 = vmatpush.bf16.msra.mxu0 0
    %196 = vmatpush.bf16.msra.mxu0 0
    %197 = vmatpush.bf16.msra.mxu0 %v184
    %198 = vmatpush.bf16.msra.mxu0 %v183
    %199 = vmatmul.bf16.gmra.mxu0 %v189
    %v200 = vpop.f32.mrf.mxu0
    %v201 = vadd.f32 0.0, %v200
    %v202 = vpop.f32.mrf.mxu0
    %203 = vdwg.mxu0
    %v204 = vld [vmem:[%s6] sm:$0xf]
    %v205 = vld [vmem:[%s6 + $0x4] sm:$0xf]
    %v206 = vld [vmem:[%s6 + $0x8] sm:$0xf]
    %v207 = vld [vmem:[%s6 + $0xc] sm:$0xf]
    %v208 = vpack.c.bf16 %v118, %v118
    %v213 = vunpack.c.l.b16 %v204
    %v214 = vunpack.c.l.b16 %v205
    %v215 = vunpack.c.l.b16 %v206
    %v216 = vunpack.c.l.b16 %v207
    %v217 = vpack.c.b16 %v214, %v213
    %v218 = vpack.c.b16 %v216, %v215
    %v222 = vsel %vm187, %v208, 0
    %224 = vmatpush.bf16.msra.mxu0 0
    %225 = vmatpush.bf16.msra.mxu0 0
    %226 = vmatpush.bf16.msra.mxu0 0
    %227 = vmatpush.bf16.msra.mxu0 0
    %228 = vmatpush.bf16.msra.mxu0 0
    %229 = vmatpush.bf16.msra.mxu0 0
    %230 = vmatpush.bf16.msra.mxu0 %v218
    %231 = vmatpush.bf16.msra.mxu0 %v217
    %232 = vmatmul.bf16.gmra.mxu0 %v222
    %v233 = vpop.f32.mrf.mxu0
    %v234 = vadd.f32 0.0, %v233
    %v235 = vpop.f32.mrf.mxu0
    %236 = vdwg.mxu0
    %v237 = vadd.f32 %v201, %v234
    %v238 = vperm.slane %v122, 0
    %v239 = vadd.f32 %v237, %v238
    %v240 = vxor.u32 %v239, 2147483648
    %v241 = vmul.f32 %v240, 1.442695
    %v242 = vpow.pop %v241
    %v243 = vadd.f32 %v242, 1.0
    %v244 = vrcp.pop %v243
    %v245 = vmul.f32 %v243, %v244
    %v246 = vsub.f32 1.0, %v245
    %v247 = vmul.f32 %v244, %v246
    %v248 = vadd.f32 %v244, %v247
    %vm249 = vweird.f32 %v243
    %vm250 = vweird.f32 %v244
    %vm251 = vmor %vm249, %vm250
    %v252 = vsel %vm251, %v244, %v248
    %v253 = vand.u32 2147483647, %v243
    %vm254 = vcmp.eq.f32.partialorder %v253, 8.507059e+37
    %v255 = vand.u32 %v243, 2147483648
    %v256 = vor.u32 1.1754944e-38, %v255
    %v257 = vsel %vm254, %v256, %v252
    %v258 = vmul.f32 1.0, %v257
    %v259 = vperm.slane %v123, 0
    %261 = vrot.lane.b32.xlu0 %v259, 32
    %v262 = vpop.permute.xlu0 %261
    %v264 = vadd.f32 %v237, %v262
    %v265 = vxor.u32 %v264, 2147483648
    %v266 = vmul.f32 %v265, 1.442695
    %v267 = vpow.pop %v266
    %v268 = vadd.f32 %v267, 1.0
    %v269 = vrcp.pop %v268
    %v270 = vmul.f32 %v268, %v269
    %v271 = vsub.f32 1.0, %v270
    %v272 = vmul.f32 %v269, %v271
    %v273 = vadd.f32 %v269, %v272
    %vm274 = vweird.f32 %v268
    %vm275 = vweird.f32 %v269
    %vm276 = vmor %vm274, %vm275
    %v277 = vsel %vm276, %v269, %v273
    %v278 = vand.u32 2147483647, %v268
    %vm279 = vcmp.eq.f32.partialorder %v278, 8.507059e+37
    %v280 = vand.u32 %v268, 2147483648
    %v281 = vor.u32 1.1754944e-38, %v280
    %v282 = vsel %vm279, %v281, %v277
    %v283 = vmul.f32 1.0, %v282
    %v284 = vperm.slane %v124, 0
    %286 = vrot.lane.b32.xlu0 %v284, 64
    %v287 = vpop.permute.xlu0 %286
    %v289 = vadd.f32 %v201, %v287
    %v290 = vperm.slane %v125, 0
    %292 = vrot.lane.b32.xlu0 %v290, 64
    %v293 = vpop.permute.xlu0 %292
    %v295 = vadd.f32 %v234, %v293
    %297 = vrot.lane.b32.xlu0 %v295, 64
    %v298 = vpop.permute.xlu0 %297
    %v300 = vmul.f32 %v258, %v298
    %302 = vrot.lane.b32.xlu0 %v300, 64
    %v303 = vpop.permute.xlu0 %302
    %v305 = vadd.f32 %v289, %v303
    %v306 = vtanh.pop %v305
    %v307 = vsub.f32 1.0, %v283
    %309 = vrot.lane.b32.xlu0 %v306, 96
    %v310 = vpop.permute.xlu0 %309
    %v312 = vmul.f32 %v307, %v310
    %314 = vrot.lane.b32.xlu0 %v118, 32
    %v315 = vpop.permute.xlu0 %314
    %v317 = vmul.f32 %v283, %v315
    %v318 = vadd.f32 %v312, %v317
    %v319 = vld [vmem:[%s7] sm:$0xf]
    %v320 = vld [vmem:[%s7 + $0x4] sm:$0xf]
    %v321 = vld [vmem:[%s7 + $0x8] sm:$0xf]
    %v322 = vld [vmem:[%s7 + $0xc] sm:$0xf]
    %v323 = vpack.c.bf16 %v318, %v318
    %v324 = vperm.slane %v126, 0
    %326 = vrot.lane.b32.xlu0 %v323, 96
    %v327 = vpop.permute.xlu0 %326
    %v332 = vunpack.c.l.b16 %v319
    %v333 = vunpack.c.l.b16 %v320
    %v334 = vunpack.c.l.b16 %v321
    %v335 = vunpack.c.l.b16 %v322
    %v336 = vpack.c.b16 %v333, %v332
    %v337 = vpack.c.b16 %v335, %v334
    %v341 = vsel %vm187, %v327, 0
    %343 = vmatpush.bf16.msra.mxu0 0
    %344 = vmatpush.bf16.msra.mxu0 0
    %345 = vmatpush.bf16.msra.mxu0 0
    %346 = vmatpush.bf16.msra.mxu0 0
    %347 = vmatpush.bf16.msra.mxu0 0
    %348 = vmatpush.bf16.msra.mxu0 0
    %349 = vmatpush.bf16.msra.mxu0 %v337
    %350 = vmatpush.bf16.msra.mxu0 %v336
    %351 = vmatmul.bf16.gmra.mxu0 %v341
    %v352 = vpop.f32.mrf.mxu0
    %v353 = vadd.f32 %v324, %v352
    %v354 = vpop.f32.mrf.mxu0
    %355 = vdwg.mxu0
    %vm356 = vcmp.gt.f32.partialorder %v353, 0.0
    %v357 = vmul.f32 %v353, 1.442695
    %v358 = vpow.pop %v357
    %v359 = vsub.f32 %v358, 1.0
    %v360 = vsel %vm356, %v353, %v359
    %v361 = vld [vmem:[%s8] sm:$0xf]
    %v362 = vld [vmem:[%s8 + $0x4] sm:$0xf]
    %v363 = vld [vmem:[%s8 + $0x8] sm:$0xf]
    %v364 = vld [vmem:[%s8 + $0xc] sm:$0xf]
    %v365 = vpack.c.bf16 %v360, %v360
    %v366 = vperm.slane %v128, 0
    %v371 = vunpack.c.l.b16 %v361
    %v372 = vunpack.c.l.b16 %v362
    %v373 = vunpack.c.l.b16 %v363
    %v374 = vunpack.c.l.b16 %v364
    %v375 = vpack.c.b16 %v372, %v371
    %v376 = vpack.c.b16 %v374, %v373
    %v380 = vsel %vm187, %v365, 0
    %382 = vmatpush.bf16.msra.mxu0 0
    %383 = vmatpush.bf16.msra.mxu0 0
    %384 = vmatpush.bf16.msra.mxu0 0
    %385 = vmatpush.bf16.msra.mxu0 0
    %386 = vmatpush.bf16.msra.mxu0 0
    %387 = vmatpush.bf16.msra.mxu0 0
    %388 = vmatpush.bf16.msra.mxu0 %v376
    %389 = vmatpush.bf16.msra.mxu0 %v375
    %390 = vmatmul.bf16.gmra.mxu0 %v380
    %v391 = vpop.f32.mrf.mxu0
    %v392 = vadd.f32 %v366, %v391
    %v393 = vpop.f32.mrf.mxu0
    %394 = vdwg.mxu0
    %v395 = vmax.f32 %v392, 0.0
    %vm396 = vcmp.ne.f32.partialorder %v392, %v392
    %v397 = vadd.f32 %v392, 0.0
    %v398 = vand.u32 2147483647, %v392
    %v399 = vsub.f32 0.0, %v398
    %v400 = vmul.f32 %v399, 1.442695
    %v401 = vpow.pop %v400
    %v402 = vadd.f32 %v401, 1.0
    %v403 = vlog2.pop %v402
    %v404 = vmul.f32 %v403, 0.6931472
    %v405 = vmul.f32 -0.5, %v401
    %v406 = vadd.f32 %v405, 1.0
    %v407 = vmul.f32 %v406, %v401
    %v408 = vand.u32 2147483647, %v401
    %vm409 = vcmp.lt.f32.partialorder %v408, 0.0004427343
    %v410 = vsel %vm409, %v407, %v404
    %v411 = vadd.f32 %v395, %v410
    %v412 = vsel %vm396, %v397, %v411
    %v413 = vadd.f32 %v412, 1000000.1
    %415 = vrot.lane.b32.xlu0 %v120, 16
    %v416 = vpop.permute.xlu0 %415
    %v418 = vmul.f32 %v413, %v416
    %420 = vrot.lane.b32.xlu0 %v418, 112
    %v421 = vpop.permute.xlu0 %420
    %v423 = vadd.f32 %v392, %v421
    %v424 = vadd.f32 %v423, 2000000.0
    %426 = vrot.lane.b32.xlu0 %v318, 96
    %v427 = vpop.permute.xlu0 %426
    %430 = vrot.lane.b32.xlu0 %v119, 32
    %v431 = vpop.permute.xlu0 %430
    %v433 = vsel %vm187, %v427, %v431
    %v434 = vld [vmem:[%s9] sm:$0xf]
    %v435 = vld [vmem:[%s9 + $0x4] sm:$0xf]
    %v436 = vld [vmem:[%s9 + $0x8] sm:$0xf]
    %v437 = vld [vmem:[%s9 + $0xc] sm:$0xf]
    %v438 = vld [vmem:[%s9 + $0x10] sm:$0xf]
    %v439 = vld [vmem:[%s9 + $0x14] sm:$0xf]
    %v440 = vld [vmem:[%s9 + $0x18] sm:$0xf]
    %v441 = vld [vmem:[%s9 + $0x1c] sm:$0xf]
    %v442 = vpack.c.bf16 %v433, %v433
    %v443 = vperm.slane %v127, 0
    %v452 = vunpack.c.l.b16 %v434
    %v453 = vunpack.c.l.b16 %v435
    %v454 = vunpack.c.l.b16 %v436
    %v455 = vunpack.c.l.b16 %v437
    %v456 = vunpack.c.l.b16 %v438
    %v457 = vunpack.c.l.b16 %v439
    %v458 = vunpack.c.l.b16 %v440
    %v459 = vunpack.c.l.b16 %v441
    %v460 = vpack.c.b16 %v453, %v452
    %v461 = vpack.c.b16 %v455, %v454
    %v462 = vpack.c.b16 %v457, %v456
    %v463 = vpack.c.b16 %v459, %v458
    %vm468 = vcmask 523264
    %v470 = vsel %vm468, %v442, 0
    %472 = vmatpush.bf16.msra.mxu0 0
    %473 = vmatpush.bf16.msra.mxu0 0
    %474 = vmatpush.bf16.msra.mxu0 0
    %475 = vmatpush.bf16.msra.mxu0 0
    %476 = vmatpush.bf16.msra.mxu0 %v463
    %477 = vmatpush.bf16.msra.mxu0 %v462
    %478 = vmatpush.bf16.msra.mxu0 %v461
    %479 = vmatpush.bf16.msra.mxu0 %v460
    %480 = vmatmul.bf16.gmra.mxu0 %v470
    %v481 = vpop.f32.mrf.mxu0
    %v482 = vadd.f32 %v443, %v481
    %v483 = vpop.f32.mrf.mxu0
    %484 = vdwg.mxu0
    %vm485 = vcmp.gt.f32.partialorder %v482, 0.0
    %v486 = vmul.f32 %v482, 1.442695
    %v487 = vpow.pop %v486
    %v488 = vsub.f32 %v487, 1.0
    %v489 = vsel %vm485, %v482, %v488
    %v490 = vld [vmem:[#allocation7] sm:$0xf]
    %v491 = vld [vmem:[#allocation7 + $0x4] sm:$0xf]
    %v492 = vld [vmem:[#allocation7 + $0x8] sm:$0xf]
    %v493 = vld [vmem:[#allocation7 + $0xc] sm:$0xf]
    %v494 = vpack.c.bf16 %v489, %v489
    %v495 = vperm.slane %v129, 0
    %v500 = vunpack.c.l.b16 %v490
    %v501 = vunpack.c.l.b16 %v491
    %v502 = vunpack.c.l.b16 %v492
    %v503 = vunpack.c.l.b16 %v493
    %v504 = vpack.c.b16 %v501, %v500
    %v505 = vpack.c.b16 %v503, %v502
    %v509 = vsel %vm187, %v494, 0
    %511 = vmatpush.bf16.msra.mxu0 0
    %512 = vmatpush.bf16.msra.mxu0 0
    %513 = vmatpush.bf16.msra.mxu0 0
    %514 = vmatpush.bf16.msra.mxu0 0
    %515 = vmatpush.bf16.msra.mxu0 0
    %516 = vmatpush.bf16.msra.mxu0 0
    %517 = vmatpush.bf16.msra.mxu0 %v505
    %518 = vmatpush.bf16.msra.mxu0 %v504
    %519 = vmatmul.bf16.gmra.mxu0 %v509
    %v520 = vpop.f32.mrf.mxu0
    %v521 = vadd.f32 %v495, %v520
    %v522 = vpop.f32.mrf.mxu0
    %523 = vdwg.mxu0
    %v524 = vmax.f32 %v521, 0.0
    %vm525 = vcmp.ne.f32.partialorder %v521, %v521
    %v526 = vadd.f32 %v521, 0.0
    %v527 = vand.u32 2147483647, %v521
    %v528 = vsub.f32 0.0, %v527
    %v529 = vmul.f32 %v528, 1.442695
    %v530 = vpow.pop %v529
    %v531 = vadd.f32 %v530, 1.0
    %v532 = vlog2.pop %v531
    %v533 = vmul.f32 %v532, 0.6931472
    %v534 = vmul.f32 -0.5, %v530
    %v535 = vadd.f32 %v534, 1.0
    %v536 = vmul.f32 %v535, %v530
    %v537 = vand.u32 2147483647, %v530
    %vm538 = vcmp.lt.f32.partialorder %v537, 0.0004427343
    %v539 = vsel %vm538, %v536, %v533
    %v540 = vadd.f32 %v524, %v539
    %v541 = vsel %vm525, %v526, %v540
    %v542 = vadd.f32 %v541, 0.1
    %v543 = vmul.f32 %v542, %v120
    %545 = vrot.lane.b32.xlu0 %v543, 112
    %v546 = vpop.permute.xlu0 %545
    %v548 = vadd.f32 %v521, %v546
    %550 = vrot.lane.b32.xlu0 %v424, 32
    %v551 = vpop.permute.xlu0 %550
    %553 = vrot.lane.b32.xlu0 %v318, 16
    %v554 = vpop.permute.xlu0 %553
    %557 = vrot.lane.b32.xlu0 %v521, 80
    %v558 = vpop.permute.xlu0 %557
    %561 = vrot.lane.b32.xlu0 %v542, 80
    %v562 = vpop.permute.xlu0 %561
    %565 = vrot.lane.b32.xlu0 %v548, 112
    %v566 = vpop.permute.xlu0 %565
    %vm568 = vcmask 130048
    %v569 = vsel %vm568, %v392, %v413
    %v570 = vsel %vm187, %v569, %v551
    %vm571 = vcmask 392192
    %v572 = vsel %vm571, %v570, %v554
    %vm573 = vcmask 654336
    %v574 = vsel %vm573, %v572, %v558
    %vm575 = vcmask 785408
    %v576 = vsel %vm575, %v574, %v562
    %vm577 = vcmask 916480
    %v578 = vsel %vm577, %v576, %v566
    %579 = vst [vmem:[%s13] sm:$0xff] %v578
    // Predicated region
    $region74: #{representation_forward.1} parent=1 // pred_check
      _
    $region75: #{representation_forward.1} parent=1 // pred_check_branch
      %581 = sbr.rel (0) target = $region77
    $region76: #{representation_forward.1} parent=1 // pred_region
      _
    $region77: #{representation_forward.1} parent=1 // pred_fallthru
      _
    // Predicated region
    $region78: #{representation_forward.1} parent=1 // pred_check
      _
    $region79: #{representation_forward.1} parent=1 // pred_check_branch
      %583 = sbr.rel (0) target = $region81
    $region80: #{representation_forward.1} parent=1 // pred_region
      _
    $region81: #{representation_forward.1} parent=1 // pred_fallthru
      _
    %584 = vsyncpa [#allocation3], 1
    %585 = vsyncpa [#allocation5], 1
    %586 = vsyncpa [#allocation8], 1

</llo_original>
